<compile_context>
chip_gen: v6e
topology: v6e:2x2x1
jax: 0.10.0
libtpu: 0.0.40
codegen_flags: <defaults>
</compile_context>

<pallas_src>
import functools

import jax
import jax.numpy as jnp
import numpy as np
from jax.experimental import pallas as pl
from jax.experimental.pallas import tpu as pltpu

LANES = 128
MAX_BATCH_TILE = 2048     # rows per grid step; keeps per-step VMEM a few MB on all chips
MIN_ROWS_PER_TILE = 256   # don't split into tiles smaller than this (step overhead dominates)


def _round_up(x: int, m: int) -> int:
    return (x + m - 1) // m * m


def _choose_tiling(B: int):
    """Pick (tile_rows, n_tiles, padded_batch) for the batch grid.

    - tile rows are a multiple of 8 (sublane constraint), capped at MAX_BATCH_TILE
    - padding is at most 7 rows beyond ceil-division waste
    - for large batches the grid is an even length >= 2 so v7x's two TensorCores both
      get work under dimension_semantics=("parallel",); extra step is harmless on v5e/v6e
    """
    bp8 = _round_up(max(B, 1), 8)
    if bp8 <= MAX_BATCH_TILE:
        n_tiles = 2 if bp8 >= 2 * MIN_ROWS_PER_TILE else 1
    else:
        n_tiles = pl.cdiv(bp8, MAX_BATCH_TILE)
        n_tiles += n_tiles % 2          # even grid length for the v7x megacore split
    tb = _round_up(pl.cdiv(B, n_tiles), 8)
    return tb, n_tiles, tb * n_tiles


def critic_kernel(s_ref, a_ref, w1s_ref, w1a_ref, b1_ref,
                  w2_ref, b2_ref, w3_ref, b3_ref, out_ref):
    # Layer 1 -- fused concat: [state | action] @ W1 == state @ W1s + action @ W1a.
    h1 = jnp.dot(s_ref[...], w1s_ref[...], preferred_element_type=jnp.float32)
    h1 = h1 + jnp.dot(a_ref[...], w1a_ref[...], preferred_element_type=jnp.float32)
    h1 = jnp.maximum(h1 + b1_ref[...], 0.0)                          # (TB, HP)

    # Layer 2.
    h2 = jnp.dot(h1, w2_ref[...], preferred_element_type=jnp.float32)
    h2 = jnp.maximum(h2 + b2_ref[...], 0.0)                          # (TB, HP)

    # Layer 3 (output width 1): plain (TB, HP) @ (HP, 1) matmul. No transpose of h2;
    # the narrow (TB, 1) store writes only TB*4 bytes per tile.
    v = jnp.dot(h2, w3_ref[...], preferred_element_type=jnp.float32)  # (TB, 1)
    out_ref[...] = (v + b3_ref[0, 0]).astype(out_ref.dtype)


def prepare_critic_params(params, state_dim):
    """Split W1 at the state/action boundary and zero-pad the hidden dim to 128 lanes."""
    w1, b1, w2, b2, w3, b3 = params
    _, h = w1.shape
    hp = _round_up(h, LANES)          # keep HP=128; do NOT over-pad to 256 (see header)
    pad = hp - h
    w1s = jnp.pad(w1[:state_dim], ((0, 0), (0, pad)))        # (S, HP)
    w1a = jnp.pad(w1[state_dim:], ((0, 0), (0, pad)))        # (A, HP)
    b1p = jnp.pad(b1.reshape(1, h), ((0, 0), (0, pad)))      # (1, HP)
    w2p = jnp.pad(w2, ((0, pad), (0, pad)))                  # (HP, HP)
    b2p = jnp.pad(b2.reshape(1, h), ((0, 0), (0, pad)))      # (1, HP)
    w3p = jnp.pad(w3.reshape(h, 1), ((0, pad), (0, 0)))      # (HP, 1) -- column vector
    b3p = b3.reshape(1, 1)                                   # (1, 1)  -- goes to SMEM
    return (w1s, w1a, b1p, w2p, b2p, w3p, b3p)


def critic_forward(state, action, prepared_params):
    """state: (B, S), action: (B, A) -> value: (B, 1)"""
    w1s, w1a, b1, w2, b2, w3, b3 = prepared_params
    B, S = state.shape
    A = action.shape[1]
    HP = w2.shape[0]

    tb, n_tiles, bp = _choose_tiling(B)
    if bp != B:
        state = jnp.pad(state, ((0, bp - B), (0, 0)))
        action = jnp.pad(action, ((0, bp - B), (0, 0)))

    const = lambda i: (0, 0)   # weights/biases: same block every grid step (VMEM-resident)
    out = pl.pallas_call(
        critic_kernel,
        out_shape=jax.ShapeDtypeStruct((bp, 1), jnp.float32),
        grid=(n_tiles,),
        in_specs=[
            pl.BlockSpec((tb, S), lambda i: (i, 0)),   # state tile   (streamed)
            pl.BlockSpec((tb, A), lambda i: (i, 0)),   # action tile  (streamed)
            pl.BlockSpec((S, HP), const),              # w1 (state rows)
            pl.BlockSpec((A, HP), const),              # w1 (action rows)
            pl.BlockSpec((1, HP), const),              # b1
            pl.BlockSpec((HP, HP), const),             # w2
            pl.BlockSpec((1, HP), const),              # b2
            pl.BlockSpec((HP, 1), const),              # w3 (column)
            pl.BlockSpec(memory_space=pltpu.MemorySpace.SMEM),   # b3 scalar in SMEM
        ],
        out_specs=pl.BlockSpec((tb, 1), lambda i: (i, 0)),
        compiler_params=pltpu.CompilerParams(
            dimension_semantics=("parallel",)),        # megacore split on v7x
    )(state, action, w1s, w1a, b1, w2, b2, w3, b3)

    return out[:B]


def xavier_uniform(key, fan_in, fan_out):
    bound = float(np.sqrt(6.0 / (fan_in + fan_out)))
    # Stored as (in, out): pre-transposed relative to torch's (out, in).
    return jax.random.uniform(key, (fan_in, fan_out), jnp.float32, -bound, bound)


def init_critic_params(key, input_size, hidden_size):
    k1, k2, k3 = jax.random.split(key, 3)
    w1 = xavier_uniform(k1, input_size, hidden_size)
    b1 = jnp.zeros((1, hidden_size), jnp.float32)
    w2 = xavier_uniform(k2, hidden_size, hidden_size)
    b2 = jnp.zeros((1, hidden_size), jnp.float32)
    w3 = xavier_uniform(k3, hidden_size, 1)
    b3 = jnp.zeros((1, 1), jnp.float32)
    return (w1, b1, w2, b2, w3, b3)


def critic_reference(state, action, params):
    w1, b1, w2, b2, w3, b3 = params
    x = jnp.concatenate([state, action], axis=1)
    h1 = jax.nn.relu(x @ w1 + b1)
    h2 = jax.nn.relu(h1 @ w2 + b2)
    return h2 @ w3 + b3


if __name__ == "__main__":
    # Shapes consistent with the module: state_dim=24, action_dim=8,
    # input_size = 32, hidden_size = 32.
    S, A, H = 24, 8, 32
    key = jax.random.PRNGKey(0)
    k_state, k_action, k_params = jax.random.split(key, 3)

    params = init_critic_params(k_params, S + A, H)
    prepared = prepare_critic_params(params, S)
    fwd = jax.jit(functools.partial(critic_forward))

    # Small batch (single grid step, tb=8).
    B = 8
    state = jax.random.normal(k_state, (B, S), jnp.float32)
    action = jax.random.normal(k_action, (B, A), jnp.float32)
    value = jax.block_until_ready(fwd(state, action, prepared))
    ref = critic_reference(state, action, params)
    np.testing.assert_allclose(np.asarray(value), np.asarray(ref), rtol=1e-5, atol=1e-5)

    # Non-multiple-of-8 batch: exercises minimal padding (300 -> 304, not 384).
    B2 = 300
    k_s2, k_a2 = jax.random.split(jax.random.PRNGKey(1))
    state2 = jax.random.normal(k_s2, (B2, S), jnp.float32)
    action2 = jax.random.normal(k_a2, (B2, A), jnp.float32)
    value2 = jax.block_until_ready(fwd(state2, action2, prepared))
    ref2 = critic_reference(state2, action2, params)
    np.testing.assert_allclose(np.asarray(value2), np.asarray(ref2), rtol=1e-5, atol=1e-5)

    # Larger batch: even 2-step grid (v7x megacore path) with VMEM-resident weights.
    B3 = 600
    k_s3, k_a3 = jax.random.split(jax.random.PRNGKey(2))
    state3 = jax.random.normal(k_s3, (B3, S), jnp.float32)
    action3 = jax.random.normal(k_a3, (B3, A), jnp.float32)
    value3 = jax.block_until_ready(fwd(state3, action3, prepared))
    ref3 = critic_reference(state3, action3, params)
    np.testing.assert_allclose(np.asarray(value3), np.asarray(ref3), rtol=1e-5, atol=1e-5)

    print("KERNEL_OK")
</pallas_src>

<mosaic_0001>
module attributes {stable_mosaic.version = 11 : i64} {
  func.func @critic_kernel(%arg0: i32, %arg1: memref<8x24xf32, #tpu.memory_space<vmem>>, %arg2: memref<8x8xf32, #tpu.memory_space<vmem>>, %arg3: memref<24x128xf32, #tpu.memory_space<vmem>>, %arg4: memref<8x128xf32, #tpu.memory_space<vmem>>, %arg5: memref<1x128xf32, #tpu.memory_space<vmem>>, %arg6: memref<128x128xf32, #tpu.memory_space<vmem>>, %arg7: memref<1x128xf32, #tpu.memory_space<vmem>>, %arg8: memref<128x1xf32, #tpu.memory_space<vmem>>, %arg9: memref<1x1xf32, #tpu.memory_space<smem>>, %arg10: memref<8x1xf32, #tpu.memory_space<vmem>>) attributes {dimension_semantics = [#tpu.dimension_semantics<parallel>], iteration_bounds = array<i64: 1>, scalar_prefetch = 0 : i64, scratch_operands = 0 : i64, tpu.core_type = #tpu.core_type<tc>, window_params = [{transform_indices = @transform_0, window_bounds = array<i64: 8, 24>}, {transform_indices = @transform_1, window_bounds = array<i64: 8, 8>}, {pipeline_mode = #tpu.pipeline_mode<synchronous>, transform_indices = @transform_2, window_bounds = array<i64: 24, 128>}, {pipeline_mode = #tpu.pipeline_mode<synchronous>, transform_indices = @transform_3, window_bounds = array<i64: 8, 128>}, {pipeline_mode = #tpu.pipeline_mode<synchronous>, transform_indices = @transform_4, window_bounds = array<i64: 1, 128>}, {pipeline_mode = #tpu.pipeline_mode<synchronous>, transform_indices = @transform_5, window_bounds = array<i64: 128, 128>}, {pipeline_mode = #tpu.pipeline_mode<synchronous>, transform_indices = @transform_6, window_bounds = array<i64: 1, 128>}, {pipeline_mode = #tpu.pipeline_mode<synchronous>, transform_indices = @transform_7, window_bounds = array<i64: 128, 1>}, {transform_indices = @transform_8, window_bounds = array<i64: 1, 1>}, {transform_indices = @transform_9, window_bounds = array<i64: 8, 1>}]} {
    %c0 = arith.constant 0 : index
    %c0_0 = arith.constant 0 : index
    %0 = vector.load %arg1[%c0, %c0_0] : memref<8x24xf32, #tpu.memory_space<vmem>>, vector<8x24xf32>
    %c0_1 = arith.constant 0 : index
    %c0_2 = arith.constant 0 : index
    %1 = vector.load %arg3[%c0_1, %c0_2] : memref<24x128xf32, #tpu.memory_space<vmem>>, vector<24x128xf32>
    %cst = arith.constant dense<0.000000e+00> : vector<8x128xf32>
    %2 = tpu.matmul %0, %1, %cst {dimension_numbers = #tpu.dot_dimension_numbers<[1], [0], [0], [1], [0, 0, 1, 1], [], []>} : vector<8x24xf32>, vector<24x128xf32>, vector<8x128xf32> -> vector<8x128xf32>
    %c0_3 = arith.constant 0 : index
    %c0_4 = arith.constant 0 : index
    %3 = vector.load %arg2[%c0_3, %c0_4] : memref<8x8xf32, #tpu.memory_space<vmem>>, vector<8x8xf32>
    %c0_5 = arith.constant 0 : index
    %c0_6 = arith.constant 0 : index
    %4 = vector.load %arg4[%c0_5, %c0_6] : memref<8x128xf32, #tpu.memory_space<vmem>>, vector<8x128xf32>
    %cst_7 = arith.constant dense<0.000000e+00> : vector<8x128xf32>
    %5 = tpu.matmul %3, %4, %cst_7 {dimension_numbers = #tpu.dot_dimension_numbers<[1], [0], [0], [1], [0, 0, 1, 1], [], []>} : vector<8x8xf32>, vector<8x128xf32>, vector<8x128xf32> -> vector<8x128xf32>
    %6 = arith.addf %2, %5 : vector<8x128xf32>
    %c0_8 = arith.constant 0 : index
    %c0_9 = arith.constant 0 : index
    %7 = vector.load %arg5[%c0_8, %c0_9] : memref<1x128xf32, #tpu.memory_space<vmem>>, vector<1x128xf32>
    %8 = vector.broadcast %7 : vector<1x128xf32> to vector<8x128xf32>
    %9 = arith.addf %6, %8 : vector<8x128xf32>
    %cst_10 = arith.constant 0.000000e+00 : f32
    %10 = vector.broadcast %cst_10 : f32 to vector<8x128xf32>
    %11 = arith.maximumf %9, %10 : vector<8x128xf32>
    %c0_11 = arith.constant 0 : index
    %c0_12 = arith.constant 0 : index
    %12 = vector.load %arg6[%c0_11, %c0_12] : memref<128x128xf32, #tpu.memory_space<vmem>>, vector<128x128xf32>
    %cst_13 = arith.constant dense<0.000000e+00> : vector<8x128xf32>
    %13 = tpu.matmul %11, %12, %cst_13 {dimension_numbers = #tpu.dot_dimension_numbers<[1], [0], [0], [1], [0, 0, 1, 1], [], []>} : vector<8x128xf32>, vector<128x128xf32>, vector<8x128xf32> -> vector<8x128xf32>
    %c0_14 = arith.constant 0 : index
    %c0_15 = arith.constant 0 : index
    %14 = vector.load %arg7[%c0_14, %c0_15] : memref<1x128xf32, #tpu.memory_space<vmem>>, vector<1x128xf32>
    %15 = vector.broadcast %14 : vector<1x128xf32> to vector<8x128xf32>
    %16 = arith.addf %13, %15 : vector<8x128xf32>
    %cst_16 = arith.constant 0.000000e+00 : f32
    %17 = vector.broadcast %cst_16 : f32 to vector<8x128xf32>
    %18 = arith.maximumf %16, %17 : vector<8x128xf32>
    %c0_17 = arith.constant 0 : index
    %c0_18 = arith.constant 0 : index
    %19 = vector.load %arg8[%c0_17, %c0_18] : memref<128x1xf32, #tpu.memory_space<vmem>>, vector<128x1xf32>
    %cst_19 = arith.constant dense<0.000000e+00> : vector<8x1xf32>
    %20 = tpu.matmul %18, %19, %cst_19 {dimension_numbers = #tpu.dot_dimension_numbers<[1], [0], [0], [1], [0, 0, 1, 1], [], []>} : vector<8x128xf32>, vector<128x1xf32>, vector<8x1xf32> -> vector<8x1xf32>
    %c0_20 = arith.constant 0 : index
    %c0_21 = arith.constant 0 : index
    %21 = memref.load %arg9[%c0_20, %c0_21] : memref<1x1xf32, #tpu.memory_space<smem>>
    %22 = vector.broadcast %21 : f32 to vector<8x1xf32>
    %23 = arith.addf %20, %22 : vector<8x1xf32>
    %c0_22 = arith.constant 0 : index
    %c0_23 = arith.constant 0 : index
    %24 = vector.load %arg10[%c0_22, %c0_23] : memref<8x1xf32, #tpu.memory_space<vmem>>, vector<8x1xf32>
    tpu.vector_store %arg10[%c0_22, %c0_23], %23 {strides = array<i32>} : memref<8x1xf32, #tpu.memory_space<vmem>>, vector<8x1xf32>,
    return
  }
  func.func @transform_0(%arg0: i32) -> (i32, i32) {
    %c0_i32 = arith.constant 0 : i32
    %c0_i32_0 = arith.constant 0 : i32
    return %arg0, %c0_i32 : i32, i32
  }
  func.func @transform_1(%arg0: i32) -> (i32, i32) {
    %c0_i32 = arith.constant 0 : i32
    %c0_i32_0 = arith.constant 0 : i32
    return %arg0, %c0_i32 : i32, i32
  }
  func.func @transform_2(%arg0: i32) -> (i32, i32) {
    %c0_i32 = arith.constant 0 : i32
    %c0_i32_0 = arith.constant 0 : i32
    %c0_i32_1 = arith.constant 0 : i32
    return %c0_i32, %c0_i32_0 : i32, i32
  }
  func.func @transform_3(%arg0: i32) -> (i32, i32) {
    %c0_i32 = arith.constant 0 : i32
    %c0_i32_0 = arith.constant 0 : i32
    %c0_i32_1 = arith.constant 0 : i32
    return %c0_i32, %c0_i32_0 : i32, i32
  }
  func.func @transform_4(%arg0: i32) -> (i32, i32) {
    %c0_i32 = arith.constant 0 : i32
    %c0_i32_0 = arith.constant 0 : i32
    %c0_i32_1 = arith.constant 0 : i32
    return %c0_i32, %c0_i32_0 : i32, i32
  }
  func.func @transform_5(%arg0: i32) -> (i32, i32) {
    %c0_i32 = arith.constant 0 : i32
    %c0_i32_0 = arith.constant 0 : i32
    %c0_i32_1 = arith.constant 0 : i32
    return %c0_i32, %c0_i32_0 : i32, i32
  }
  func.func @transform_6(%arg0: i32) -> (i32, i32) {
    %c0_i32 = arith.constant 0 : i32
    %c0_i32_0 = arith.constant 0 : i32
    %c0_i32_1 = arith.constant 0 : i32
    return %c0_i32, %c0_i32_0 : i32, i32
  }
  func.func @transform_7(%arg0: i32) -> (i32, i32) {
    %c0_i32 = arith.constant 0 : i32
    %c0_i32_0 = arith.constant 0 : i32
    %c0_i32_1 = arith.constant 0 : i32
    return %c0_i32, %c0_i32_0 : i32, i32
  }
  func.func @transform_8(%arg0: i32) -> (i32, i32) {
    %c0_i32 = arith.constant 0 : i32
    %c0_i32_0 = arith.constant 0 : i32
    %c0_i32_1 = arith.constant 0 : i32
    return %c0_i32, %c0_i32_0 : i32, i32
  }
  func.func @transform_9(%arg0: i32) -> (i32, i32) {
    %c0_i32 = arith.constant 0 : i32
    %c0_i32_0 = arith.constant 0 : i32
    return %arg0, %c0_i32 : i32, i32
  }
}

</mosaic_0001>

<llo_original>
// kernel: critic_forward.1
$region0: #{critic_forward.1}
  #allocation0 [shape = 'u32[]', space=smem, size = 0x4, offset = 0x4, fixed_abs, tag = 'smem constant byte address 0x4 - core index']
  #allocation1 [shape = 'u32[144,128]{1,0:T(1,128)}', space=vmem, size = 0x12000, scoped, tag = 'internal scratch']
  #allocation2 [shape = 'f32[1,1]{1,0:T(1,128)S(6)}', space=smem, size = 0x200, scoped, tag = 'scoped memory for critic_forward.1']
  %s0 = inlined_call_operand.vmem [shape: f32[8,24], index: 0, kind: input, shape index: {}]
  %s1 = inlined_call_operand.hbm [shape: f32[8,8], index: 1, kind: input, shape index: {}]
  %s2 = inlined_call_operand.hbm [shape: f32[24,128], index: 2, kind: input, shape index: {}]
  %s3 = inlined_call_operand.hbm [shape: f32[8,128], index: 3, kind: input, shape index: {}]
  %s4 = inlined_call_operand.vmem [shape: f32[1,128], index: 4, kind: input, shape index: {}]
  %s5 = inlined_call_operand.vmem [shape: f32[128,128], index: 5, kind: input, shape index: {}]
  %s6 = inlined_call_operand.vmem [shape: f32[1,128], index: 6, kind: input, shape index: {}]
  %s7 = inlined_call_operand.vmem [shape: f32[128,1], index: 7, kind: input, shape index: {}]
  %s8 = inlined_call_operand.<no memory space> [shape: f32[1,1], index: 8, kind: input, shape index: {}]
  %s9 = inlined_call_operand.vmem [shape: f32[8,1], index: 9, kind: output, shape index: {}]
  %s10 = sld [smem:[#allocation0]]
  $region58: #{critic_forward.1} parent=0
    _
  %s12 = ssub.s32 1, %s10
  %s13 = scalar_select 0, %s12, %s10
  %14 = sst [smem:[#allocation2]] %s8
  $region1: #{critic_forward.1} parent=0
    #allocation3 [shape = 'u8[4096]{0}', space=vmem, size = 0x1000, scoped, tag = 'input window, operand 1, single buffered']
    #allocation4 [shape = 's32[1]{0}', space=sflag, size = 0x4, scoped, tag = 'scoped memory for critic_forward.1']
    #allocation5 [shape = 'u8[12288]{0}', space=vmem, size = 0x3000, scoped, tag = 'input window, operand 2, single buffered']
    #allocation6 [shape = 's32[1]{0}', space=sflag, size = 0x4, scoped, tag = 'scoped memory for critic_forward.1']
    #allocation7 [shape = 'u8[4096]{0}', space=vmem, size = 0x1000, scoped, tag = 'input window, operand 3, single buffered']
    %15 = vsyncpa [#allocation4], 0
    %16 = vsyncpa [#allocation6], 0
    // Predicated region
    $region2: #{critic_forward.1} parent=1 // pred_check
      _
    $region3: #{critic_forward.1} parent=1 // pred_check_branch
      %18 = sbr.rel (0) target = $region5
    $region4: #{critic_forward.1} parent=1 // pred_region
      _
    $region5: #{critic_forward.1} parent=1 // pred_fallthru
      _
    // Predicated region
    $region6: #{critic_forward.1} parent=1 // pred_check
      _
    $region7: #{critic_forward.1} parent=1 // pred_check_branch
      %20 = sbr.rel (0) target = $region9
    $region8: #{critic_forward.1} parent=1 // pred_region
      %s22 = ssub.s32 128, 128
      %23 = vsyncadd [#allocation4], %s22
      %s25 = sshll.u32 [#allocation3], 4
      %s26 = int_to_ptr.vmem [resolvable:$true] %s25
      %28 = dma.hbm_to_vmem [thread:$0]  %s1, 128, %s26, [#allocation4]
    $region9: #{critic_forward.1} parent=1 // pred_fallthru
      _
    // Predicated region
    $region10: #{critic_forward.1} parent=1 // pred_check
      _
    $region11: #{critic_forward.1} parent=1 // pred_check_branch
      %30 = sbr.rel (0) target = $region13
    $region12: #{critic_forward.1} parent=1 // pred_region
      %s32 = ssub.s32 384, 384
      %33 = vsyncadd [#allocation6], %s32
      %s34 = sshll.u32 [#allocation5], 4
      %s35 = int_to_ptr.vmem [resolvable:$true] %s34
      %40 = dma.hbm_to_vmem [thread:$0]  %s2, 384, %s35, [#allocation6], 128, 128, 8
    $region13: #{critic_forward.1} parent=1 // pred_fallthru
      _
    // Predicated region
    $region14: #{critic_forward.1} parent=1 // pred_check
      _
    $region15: #{critic_forward.1} parent=1 // pred_check_branch
      %42 = sbr.rel (0) target = $region17
    $region16: #{critic_forward.1} parent=1 // pred_region
      %s44 = ssub.s32 128, 128
      %45 = vsyncadd [#allocation6], %s44
      %s47 = sshll.u32 [#allocation7], 4
      %s48 = int_to_ptr.vmem [resolvable:$true] %s47
      %50 = dma.hbm_to_vmem [thread:$0]  %s3, 128, %s48, [#allocation6]
    $region17: #{critic_forward.1} parent=1 // pred_fallthru
      _
    // Predicated region
    $region18: #{critic_forward.1} parent=1 // pred_check
      _
    $region19: #{critic_forward.1} parent=1 // pred_check_branch
      %52 = sbr.rel (0) target = $region21
    $region20: #{critic_forward.1} parent=1 // pred_region
      _
    $region21: #{critic_forward.1} parent=1 // pred_fallthru
      _
    // Predicated region
    $region22: #{critic_forward.1} parent=1 // pred_check
      _
    $region23: #{critic_forward.1} parent=1 // pred_check_branch
      %54 = sbr.rel (0) target = $region25
    $region24: #{critic_forward.1} parent=1 // pred_region
      _
    $region25: #{critic_forward.1} parent=1 // pred_fallthru
      _
    // Predicated region
    $region26: #{critic_forward.1} parent=1 // pred_check
      _
    $region27: #{critic_forward.1} parent=1 // pred_check_branch
      %56 = sbr.rel (0) target = $region29
    $region28: #{critic_forward.1} parent=1 // pred_region
      _
    $region29: #{critic_forward.1} parent=1 // pred_fallthru
      _
    // Predicated region
    $region30: #{critic_forward.1} parent=1 // pred_check
      _
    $region31: #{critic_forward.1} parent=1 // pred_check_branch
      %58 = sbr.rel (0) target = $region33
    $region32: #{critic_forward.1} parent=1 // pred_region
      _
    $region33: #{critic_forward.1} parent=1 // pred_fallthru
      _
    // Predicated region
    $region34: #{critic_forward.1} parent=1 // pred_check
      _
    $region35: #{critic_forward.1} parent=1 // pred_check_branch
      %60 = sbr.rel (0) target = $region37
    $region36: #{critic_forward.1} parent=1 // pred_region
      _
    $region37: #{critic_forward.1} parent=1 // pred_fallthru
      _
    // Predicated region
    $region38: #{critic_forward.1} parent=1 // pred_check
      _
    $region39: #{critic_forward.1} parent=1 // pred_check_branch
      %62 = sbr.rel (0) target = $region41
    $region40: #{critic_forward.1} parent=1 // pred_region
      %63 = dma.done [#allocation4], 128
    $region41: #{critic_forward.1} parent=1 // pred_fallthru
      _
    // Predicated region
    $region42: #{critic_forward.1} parent=1 // pred_check
      _
    $region43: #{critic_forward.1} parent=1 // pred_check_branch
      %65 = sbr.rel (0) target = $region45
    $region44: #{critic_forward.1} parent=1 // pred_region
      %66 = dma.done [#allocation6], 384
    $region45: #{critic_forward.1} parent=1 // pred_fallthru
      _
    // Predicated region
    $region46: #{critic_forward.1} parent=1 // pred_check
      _
    $region47: #{critic_forward.1} parent=1 // pred_check_branch
      %68 = sbr.rel (0) target = $region49
    $region48: #{critic_forward.1} parent=1 // pred_region
      %69 = dma.done [#allocation6], 128
    $region49: #{critic_forward.1} parent=1 // pred_fallthru
      _
    %v70 = vld [vmem:[%s0] sm:$0xff]
    %v71 = vld [vmem:[#allocation5] sm:$0xff]
    %v72 = vld [vmem:[#allocation5 + $0x8] sm:$0xff]
    %v73 = vld [vmem:[#allocation5 + $0x10] sm:$0xff]
    %v74 = vld [vmem:[#allocation3] sm:$0xff]
    %v75 = vld [vmem:[#allocation7] sm:$0xff]
    %vm76 = vcmask 64512
    %v78 = vsel %vm76, %v74, 0
    %80 = vmatprep.subr.mxu0 0.0
    %81 = vmatpush1.msra.mxu0 0.0
    %82 = vmatprep.subr.mxu0 0.0
    %83 = vmatpush1.msra.mxu0 0.0
    %84 = vmatprep.subr.mxu0 0.0
    %85 = vmatpush1.msra.mxu0 0.0
    %86 = vmatprep.subr.mxu0 0.0
    %87 = vmatpush1.msra.mxu0 0.0
    %88 = vmatprep.subr.mxu0 0.0
    %89 = vmatpush1.msra.mxu0 0.0
    %90 = vmatprep.subr.mxu0 0.0
    %91 = vmatpush1.msra.mxu0 0.0
    %92 = vmatprep.subr.mxu0 0.0
    %93 = vmatpush1.msra.mxu0 0.0
    %94 = vmatprep.subr.mxu0 0.0
    %95 = vmatpush1.msra.mxu0 0.0
    %96 = vmatprep.subr.mxu0 0.0
    %97 = vmatpush1.msra.mxu0 0.0
    %98 = vmatprep.subr.mxu0 0.0
    %99 = vmatpush1.msra.mxu0 0.0
    %100 = vmatprep.subr.mxu0 0.0
    %101 = vmatpush1.msra.mxu0 0.0
    %102 = vmatprep.subr.mxu0 0.0
    %103 = vmatpush1.msra.mxu0 0.0
    %104 = vmatprep.subr.mxu0 0.0
    %105 = vmatpush1.msra.mxu0 0.0
    %106 = vmatprep.subr.mxu0 0.0
    %107 = vmatpush1.msra.mxu0 0.0
    %108 = vmatprep.subr.mxu0 0.0
    %109 = vmatpush1.msra.mxu0 0.0
    %110 = vmatprep.subr.mxu0 0.0
    %111 = vmatpush1.msra.mxu0 %v75
    %112 = vmatprep.subr.mxu0 0.0
    %113 = vmatpush2.msra.mxu0 0.0
    %114 = vmatprep.subr.mxu0 0.0
    %115 = vmatpush2.msra.mxu0 0.0
    %116 = vmatprep.subr.mxu0 0.0
    %117 = vmatpush2.msra.mxu0 0.0
    %118 = vmatprep.subr.mxu0 0.0
    %119 = vmatpush2.msra.mxu0 0.0
    %120 = vmatprep.subr.mxu0 0.0
    %121 = vmatpush2.msra.mxu0 0.0
    %122 = vmatprep.subr.mxu0 0.0
    %123 = vmatpush2.msra.mxu0 0.0
    %124 = vmatprep.subr.mxu0 0.0
    %125 = vmatpush2.msra.mxu0 0.0
    %126 = vmatprep.subr.mxu0 0.0
    %127 = vmatpush2.msra.mxu0 0.0
    %128 = vmatprep.subr.mxu0 0.0
    %129 = vmatpush2.msra.mxu0 0.0
    %130 = vmatprep.subr.mxu0 0.0
    %131 = vmatpush2.msra.mxu0 0.0
    %132 = vmatprep.subr.mxu0 0.0
    %133 = vmatpush2.msra.mxu0 0.0
    %134 = vmatprep.subr.mxu0 0.0
    %135 = vmatpush2.msra.mxu0 0.0
    %136 = vmatprep.subr.mxu0 0.0
    %137 = vmatpush2.msra.mxu0 0.0
    %138 = vmatprep.subr.mxu0 0.0
    %139 = vmatpush2.msra.mxu0 0.0
    %140 = vmatprep.subr.mxu0 0.0
    %141 = vmatpush2.msra.mxu0 0.0
    %142 = vmatprep.subr.mxu0 0.0
    %143 = vmatpush2.msra.mxu0 0.0
    %144 = vmatprep.mubr.f32.mxu0 0.0
    %145 = vmatmul.mubr.f32.gmra.mxu0 %v78
    %v146 = vpop.f32.mrf.mxu0
    %v147 = vadd.f32 0.0, %v146
    %v148 = vpop.f32.mrf.mxu0
    %149 = vdwg.mxu0
    %vm150 = vcmask 195584
    %v152 = vsel %vm150, %v70, 0
    %154 = vmatprep.subr.mxu0 0.0
    %155 = vmatpush1.msra.mxu0 0.0
    %156 = vmatprep.subr.mxu0 0.0
    %157 = vmatpush1.msra.mxu0 0.0
    %158 = vmatprep.subr.mxu0 0.0
    %159 = vmatpush1.msra.mxu0 0.0
    %160 = vmatprep.subr.mxu0 0.0
    %161 = vmatpush1.msra.mxu0 0.0
    %162 = vmatprep.subr.mxu0 0.0
    %163 = vmatpush1.msra.mxu0 0.0
    %164 = vmatprep.subr.mxu0 0.0
    %165 = vmatpush1.msra.mxu0 0.0
    %166 = vmatprep.subr.mxu0 0.0
    %167 = vmatpush1.msra.mxu0 0.0
    %168 = vmatprep.subr.mxu0 0.0
    %169 = vmatpush1.msra.mxu0 0.0
    %170 = vmatprep.subr.mxu0 0.0
    %171 = vmatpush1.msra.mxu0 0.0
    %172 = vmatprep.subr.mxu0 0.0
    %173 = vmatpush1.msra.mxu0 0.0
    %174 = vmatprep.subr.mxu0 0.0
    %175 = vmatpush1.msra.mxu0 0.0
    %176 = vmatprep.subr.mxu0 0.0
    %177 = vmatpush1.msra.mxu0 0.0
    %178 = vmatprep.subr.mxu0 0.0
    %179 = vmatpush1.msra.mxu0 0.0
    %180 = vmatprep.subr.mxu0 0.0
    %181 = vmatpush1.msra.mxu0 %v73
    %182 = vmatprep.subr.mxu0 0.0
    %183 = vmatpush1.msra.mxu0 %v72
    %184 = vmatprep.subr.mxu0 0.0
    %185 = vmatpush1.msra.mxu0 %v71
    %186 = vmatprep.subr.mxu0 0.0
    %187 = vmatpush2.msra.mxu0 0.0
    %188 = vmatprep.subr.mxu0 0.0
    %189 = vmatpush2.msra.mxu0 0.0
    %190 = vmatprep.subr.mxu0 0.0
    %191 = vmatpush2.msra.mxu0 0.0
    %192 = vmatprep.subr.mxu0 0.0
    %193 = vmatpush2.msra.mxu0 0.0
    %194 = vmatprep.subr.mxu0 0.0
    %195 = vmatpush2.msra.mxu0 0.0
    %196 = vmatprep.subr.mxu0 0.0
    %197 = vmatpush2.msra.mxu0 0.0
    %198 = vmatprep.subr.mxu0 0.0
    %199 = vmatpush2.msra.mxu0 0.0
    %200 = vmatprep.subr.mxu0 0.0
    %201 = vmatpush2.msra.mxu0 0.0
    %202 = vmatprep.subr.mxu0 0.0
    %203 = vmatpush2.msra.mxu0 0.0
    %204 = vmatprep.subr.mxu0 0.0
    %205 = vmatpush2.msra.mxu0 0.0
    %206 = vmatprep.subr.mxu0 0.0
    %207 = vmatpush2.msra.mxu0 0.0
    %208 = vmatprep.subr.mxu0 0.0
    %209 = vmatpush2.msra.mxu0 0.0
    %210 = vmatprep.subr.mxu0 0.0
    %211 = vmatpush2.msra.mxu0 0.0
    %212 = vmatprep.subr.mxu0 0.0
    %213 = vmatpush2.msra.mxu0 0.0
    %214 = vmatprep.subr.mxu0 0.0
    %215 = vmatpush2.msra.mxu0 0.0
    %216 = vmatprep.subr.mxu0 0.0
    %217 = vmatpush2.msra.mxu0 0.0
    %218 = vmatprep.mubr.f32.mxu0 0.0
    %219 = vmatmul.mubr.f32.gmra.mxu0 %v152
    %v220 = vpop.f32.mrf.mxu0
    %v221 = vadd.f32 %v147, %v220
    %v222 = vpop.f32.mrf.mxu0
    %223 = vdwg.mxu0
    %v224 = vld [vmem:[%s4] sm:$0x1]
    %v226 = vlaneseq
    %v227 = vshrl.u32 %v226, 7
    %v228 = vsub.s32 0, %v227
    %v229 = vrot.slane %v224, %v228
    %v231 = vadd.f32 %v221, %v229
    %v232 = vmax.f32 %v231, 0.0
    %v233 = vld [vmem:[%s5] sm:$0xff]
    %v234 = vld [vmem:[%s5 + $0x8] sm:$0xff]
    %v235 = vld [vmem:[%s5 + $0x10] sm:$0xff]
    %v236 = vld [vmem:[%s5 + $0x18] sm:$0xff]
    %v237 = vld [vmem:[%s5 + $0x20] sm:$0xff]
    %v238 = vld [vmem:[%s5 + $0x28] sm:$0xff]
    %v239 = vld [vmem:[%s5 + $0x30] sm:$0xff]
    %v240 = vld [vmem:[%s5 + $0x38] sm:$0xff]
    %v241 = vld [vmem:[%s5 + $0x40] sm:$0xff]
    %v242 = vld [vmem:[%s5 + $0x48] sm:$0xff]
    %v243 = vld [vmem:[%s5 + $0x50] sm:$0xff]
    %v244 = vld [vmem:[%s5 + $0x58] sm:$0xff]
    %v245 = vld [vmem:[%s5 + $0x60] sm:$0xff]
    %v246 = vld [vmem:[%s5 + $0x68] sm:$0xff]
    %v247 = vld [vmem:[%s5 + $0x70] sm:$0xff]
    %v248 = vld [vmem:[%s5 + $0x78] sm:$0xff]
    %v249 = vld [vmem:[%s6] sm:$0x1]
    %v251 = vlaneseq
    %v252 = vshrl.u32 %v251, 7
    %v253 = vsub.s32 0, %v252
    %v254 = vrot.slane %v249, %v253
    %256 = vmatprep.subr.mxu0 0.0
    %257 = vmatpush1.msra.mxu0 %v248
    %258 = vmatprep.subr.mxu0 0.0
    %259 = vmatpush1.msra.mxu0 %v247
    %260 = vmatprep.subr.mxu0 0.0
    %261 = vmatpush1.msra.mxu0 %v246
    %262 = vmatprep.subr.mxu0 0.0
    %263 = vmatpush1.msra.mxu0 %v245
    %264 = vmatprep.subr.mxu0 0.0
    %265 = vmatpush1.msra.mxu0 %v244
    %266 = vmatprep.subr.mxu0 0.0
    %267 = vmatpush1.msra.mxu0 %v243
    %268 = vmatprep.subr.mxu0 0.0
    %269 = vmatpush1.msra.mxu0 %v242
    %270 = vmatprep.subr.mxu0 0.0
    %271 = vmatpush1.msra.mxu0 %v241
    %272 = vmatprep.subr.mxu0 0.0
    %273 = vmatpush1.msra.mxu0 %v240
    %274 = vmatprep.subr.mxu0 0.0
    %275 = vmatpush1.msra.mxu0 %v239
    %276 = vmatprep.subr.mxu0 0.0
    %277 = vmatpush1.msra.mxu0 %v238
    %278 = vmatprep.subr.mxu0 0.0
    %279 = vmatpush1.msra.mxu0 %v237
    %280 = vmatprep.subr.mxu0 0.0
    %281 = vmatpush1.msra.mxu0 %v236
    %282 = vmatprep.subr.mxu0 0.0
    %283 = vmatpush1.msra.mxu0 %v235
    %284 = vmatprep.subr.mxu0 0.0
    %285 = vmatpush1.msra.mxu0 %v234
    %286 = vmatprep.subr.mxu0 0.0
    %287 = vmatpush1.msra.mxu0 %v233
    %288 = vmatprep.subr.mxu0 0.0
    %289 = vmatpush2.msra.mxu0 0.0
    %290 = vmatprep.subr.mxu0 0.0
    %291 = vmatpush2.msra.mxu0 0.0
    %292 = vmatprep.subr.mxu0 0.0
    %293 = vmatpush2.msra.mxu0 0.0
    %294 = vmatprep.subr.mxu0 0.0
    %295 = vmatpush2.msra.mxu0 0.0
    %296 = vmatprep.subr.mxu0 0.0
    %297 = vmatpush2.msra.mxu0 0.0
    %298 = vmatprep.subr.mxu0 0.0
    %299 = vmatpush2.msra.mxu0 0.0
    %300 = vmatprep.subr.mxu0 0.0
    %301 = vmatpush2.msra.mxu0 0.0
    %302 = vmatprep.subr.mxu0 0.0
    %303 = vmatpush2.msra.mxu0 0.0
    %304 = vmatprep.subr.mxu0 0.0
    %305 = vmatpush2.msra.mxu0 0.0
    %306 = vmatprep.subr.mxu0 0.0
    %307 = vmatpush2.msra.mxu0 0.0
    %308 = vmatprep.subr.mxu0 0.0
    %309 = vmatpush2.msra.mxu0 0.0
    %310 = vmatprep.subr.mxu0 0.0
    %311 = vmatpush2.msra.mxu0 0.0
    %312 = vmatprep.subr.mxu0 0.0
    %313 = vmatpush2.msra.mxu0 0.0
    %314 = vmatprep.subr.mxu0 0.0
    %315 = vmatpush2.msra.mxu0 0.0
    %316 = vmatprep.subr.mxu0 0.0
    %317 = vmatpush2.msra.mxu0 0.0
    %318 = vmatprep.subr.mxu0 0.0
    %319 = vmatpush2.msra.mxu0 0.0
    %320 = vmatprep.mubr.f32.mxu0 0.0
    %321 = vmatmul.mubr.f32.gmra.mxu0 %v232
    %v322 = vpop.f32.mrf.mxu0
    %v323 = vadd.f32 %v254, %v322
    %v324 = vpop.f32.mrf.mxu0
    %325 = vdwg.mxu0
    %v326 = vmax.f32 %v323, 0.0
    %v327 = vld [vmem:[%s7] sm:$0xff]
    %v328 = vld [vmem:[%s7 + $0x8] sm:$0xff]
    %v329 = vld [vmem:[%s7 + $0x10] sm:$0xff]
    %v330 = vld [vmem:[%s7 + $0x18] sm:$0xff]
    %v331 = vld [vmem:[%s7 + $0x20] sm:$0xff]
    %v332 = vld [vmem:[%s7 + $0x28] sm:$0xff]
    %v333 = vld [vmem:[%s7 + $0x30] sm:$0xff]
    %v334 = vld [vmem:[%s7 + $0x38] sm:$0xff]
    %v335 = vld [vmem:[%s7 + $0x40] sm:$0xff]
    %v336 = vld [vmem:[%s7 + $0x48] sm:$0xff]
    %v337 = vld [vmem:[%s7 + $0x50] sm:$0xff]
    %v338 = vld [vmem:[%s7 + $0x58] sm:$0xff]
    %v339 = vld [vmem:[%s7 + $0x60] sm:$0xff]
    %v340 = vld [vmem:[%s7 + $0x68] sm:$0xff]
    %v341 = vld [vmem:[%s7 + $0x70] sm:$0xff]
    %v342 = vld [vmem:[%s7 + $0x78] sm:$0xff]
    %s343 = sld [smem:[#allocation2]]
    %v344 = vstv %s343
    %345 = vmatprep.subr.mxu0 0.0
    %346 = vmatpush1.msra.mxu0 %v342
    %347 = vmatprep.subr.mxu0 0.0
    %348 = vmatpush1.msra.mxu0 %v341
    %349 = vmatprep.subr.mxu0 0.0
    %350 = vmatpush1.msra.mxu0 %v340
    %351 = vmatprep.subr.mxu0 0.0
    %352 = vmatpush1.msra.mxu0 %v339
    %353 = vmatprep.subr.mxu0 0.0
    %354 = vmatpush1.msra.mxu0 %v338
    %355 = vmatprep.subr.mxu0 0.0
    %356 = vmatpush1.msra.mxu0 %v337
    %357 = vmatprep.subr.mxu0 0.0
    %358 = vmatpush1.msra.mxu0 %v336
    %359 = vmatprep.subr.mxu0 0.0
    %360 = vmatpush1.msra.mxu0 %v335
    %361 = vmatprep.subr.mxu0 0.0
    %362 = vmatpush1.msra.mxu0 %v334
    %363 = vmatprep.subr.mxu0 0.0
    %364 = vmatpush1.msra.mxu0 %v333
    %365 = vmatprep.subr.mxu0 0.0
    %366 = vmatpush1.msra.mxu0 %v332
    %367 = vmatprep.subr.mxu0 0.0
    %368 = vmatpush1.msra.mxu0 %v331
    %369 = vmatprep.subr.mxu0 0.0
    %370 = vmatpush1.msra.mxu0 %v330
    %371 = vmatprep.subr.mxu0 0.0
    %372 = vmatpush1.msra.mxu0 %v329
    %373 = vmatprep.subr.mxu0 0.0
    %374 = vmatpush1.msra.mxu0 %v328
    %375 = vmatprep.subr.mxu0 0.0
    %376 = vmatpush1.msra.mxu0 %v327
    %377 = vmatprep.subr.mxu0 0.0
    %378 = vmatpush2.msra.mxu0 0.0
    %379 = vmatprep.subr.mxu0 0.0
    %380 = vmatpush2.msra.mxu0 0.0
    %381 = vmatprep.subr.mxu0 0.0
    %382 = vmatpush2.msra.mxu0 0.0
    %383 = vmatprep.subr.mxu0 0.0
    %384 = vmatpush2.msra.mxu0 0.0
    %385 = vmatprep.subr.mxu0 0.0
    %386 = vmatpush2.msra.mxu0 0.0
    %387 = vmatprep.subr.mxu0 0.0
    %388 = vmatpush2.msra.mxu0 0.0
    %389 = vmatprep.subr.mxu0 0.0
    %390 = vmatpush2.msra.mxu0 0.0
    %391 = vmatprep.subr.mxu0 0.0
    %392 = vmatpush2.msra.mxu0 0.0
    %393 = vmatprep.subr.mxu0 0.0
    %394 = vmatpush2.msra.mxu0 0.0
    %395 = vmatprep.subr.mxu0 0.0
    %396 = vmatpush2.msra.mxu0 0.0
    %397 = vmatprep.subr.mxu0 0.0
    %398 = vmatpush2.msra.mxu0 0.0
    %399 = vmatprep.subr.mxu0 0.0
    %400 = vmatpush2.msra.mxu0 0.0
    %401 = vmatprep.subr.mxu0 0.0
    %402 = vmatpush2.msra.mxu0 0.0
    %403 = vmatprep.subr.mxu0 0.0
    %404 = vmatpush2.msra.mxu0 0.0
    %405 = vmatprep.subr.mxu0 0.0
    %406 = vmatpush2.msra.mxu0 0.0
    %407 = vmatprep.subr.mxu0 0.0
    %408 = vmatpush2.msra.mxu0 0.0
    %409 = vmatprep.mubr.f32.mxu0 0.0
    %410 = vmatmul.mubr.f32.gmra.mxu0 %v326
    %v411 = vpop.f32.mrf.mxu0
    %v412 = vadd.f32 %v344, %v411
    %v413 = vpop.f32.mrf.mxu0
    %414 = vdwg.mxu0
    %vm415 = vcmask 7168
    %416 = vst.msk [vmem:[%s9] sm:$0xff] %vm415, %v412
    // Predicated region
    $region50: #{critic_forward.1} parent=1 // pred_check
      _
    $region51: #{critic_forward.1} parent=1 // pred_check_branch
      %418 = sbr.rel (0) target = $region53
    $region52: #{critic_forward.1} parent=1 // pred_region
      _
    $region53: #{critic_forward.1} parent=1 // pred_fallthru
      _
    // Predicated region
    $region54: #{critic_forward.1} parent=1 // pred_check
      _
    $region55: #{critic_forward.1} parent=1 // pred_check_branch
      %420 = sbr.rel (0) target = $region57
    $region56: #{critic_forward.1} parent=1 // pred_region
      _
    $region57: #{critic_forward.1} parent=1 // pred_fallthru
      _
    %421 = vsyncpa [#allocation4], 1
    %422 = vsyncpa [#allocation6], 1

</llo_original>
